<compile_context>
chip_gen: v6e
topology: v6e:2x2x1
jax: 0.10.0
libtpu: 0.0.40
codegen_flags: <defaults>
</compile_context>

<pallas_src>
import jax
import jax.numpy as jnp
from jax.experimental import pallas as pl
from jax.experimental.pallas import tpu as pltpu


_MAX_DEPTH = 4        # max rows of HBM->HBM DMAs kept in flight per core
_NUM_CORE_SPLITS = 2  # outer "parallel" grid axis (megacore on v7x; harmless elsewhere)


# ----------------------------------------------------------------------------
# Pallas gather kernel (pure HBM->HBM row-DMA gather)
# ----------------------------------------------------------------------------
def _make_gather_kernel(n, rpc, depth, n_streams):
    """n: total output rows, rpc: inner grid extent (rows per core),
    depth: DMA pipeline depth (<= rpc), n_streams: number of [T, D] streams."""

    def kernel(t_ref, *args):
        srcs = args[:n_streams]                      # HBM refs [T, D_k]
        dsts = args[n_streams:2 * n_streams]         # HBM refs [n, D_k]
        sem = args[2 * n_streams]                    # DMA sems (depth, n_streams)

        c = pl.program_id(0)                         # "parallel" core split
        j = pl.program_id(1)                         # "arbitrary" row step

        def row_of(step):
            # Clamp so padded tail steps on the last core just re-copy row n-1
            # (identical bytes -> benign duplicate write, never OOB, and the
            # clamp target is always inside the last core's own row range).
            return jnp.minimum(c * rpc + step, n - 1)

        def start_row(step, slot):
            r = row_of(step)
            src_t = t_ref[r]                         # SMEM scalar read
            for k in range(n_streams):
                pltpu.make_async_copy(
                    srcs[k].at[pl.ds(src_t, 1)],
                    dsts[k].at[pl.ds(r, 1)],
                    sem.at[slot, k],
                ).start()

        def wait_row(slot):
            # Dummy descriptor: only the byte count must match the in-flight
            # copy -- always (1, D_k) per stream, indices are irrelevant.
            for k in range(n_streams):
                pltpu.make_async_copy(
                    srcs[k].at[pl.ds(0, 1)],
                    dsts[k].at[pl.ds(0, 1)],
                    sem.at[slot, k],
                ).wait()

        # Prime: put `depth` rows in flight at the start of this core's range.
        @pl.when(j == 0)
        def _():
            for d in range(depth):
                start_row(d, d)

        # Retire row j ...
        wait_row(j % depth)

        # ... and refill its semaphore slot with row j + depth.
        @pl.when(j + depth < rpc)
        def _():
            start_row(j + depth, j % depth)

    return kernel


def _pallas_gather(t_idx, streams):
    """Gather rows t_idx[i] of every stream (each shaped [T, D_k]) into
    output row i of a same-dtype [N, D_k] array, for all streams at once."""
    n = int(t_idx.shape[0])
    n_streams = len(streams)

    n_cores = _NUM_CORE_SPLITS if n >= 2 else 1
    rpc = -(-n // n_cores)                    # rows per core (ceil)
    depth = max(1, min(_MAX_DEPTH, rpc))      # DMA pipeline depth

    out_shape = [jax.ShapeDtypeStruct((n, int(a.shape[1])), a.dtype)
                 for a in streams]
    bytes_accessed = 2 * n * sum(
        int(a.shape[1]) * jnp.dtype(a.dtype).itemsize for a in streams)

    grid_spec = pltpu.PrefetchScalarGridSpec(
        num_scalar_prefetch=1,
        grid=(n_cores, rpc),
        in_specs=[pl.BlockSpec(memory_space=pl.ANY)] * n_streams,
        out_specs=[pl.BlockSpec(memory_space=pl.ANY)] * n_streams,
        scratch_shapes=[pltpu.SemaphoreType.DMA((depth, n_streams))],
    )

    fn = pl.pallas_call(
        _make_gather_kernel(n, rpc, depth, n_streams),
        grid_spec=grid_spec,
        out_shape=out_shape,
        compiler_params=pltpu.CompilerParams(
            dimension_semantics=("parallel", "arbitrary"),
        ),
        cost_estimate=pl.CostEstimate(
            flops=0, transcendentals=0, bytes_accessed=int(bytes_accessed)),
    )
    return fn(t_idx, *streams)


# ----------------------------------------------------------------------------
# Module wrapper (glue in plain JAX, gather hot path in Pallas)
# ----------------------------------------------------------------------------
class RealDataOptimizablePoseProviderPoseStyle:
    def __init__(self, dataset, balance=True, image_dtype=None):
        rgb = jnp.asarray(dataset["rgb"])        # [T, H, W, 3]
        mask = jnp.asarray(dataset["mask"])      # [T, H, W]
        normal = jnp.asarray(dataset["normal"])  # [T, H, W, 3]
        depth = jnp.asarray(dataset["depth"])    # [T, H, W]
        K = jnp.asarray(dataset["K"])            # [T, 3, 3]
        pose = jnp.asarray(dataset["pose"])      # [T, 24, 3]
        trans = jnp.asarray(dataset["trans"])    # [T, 3]
        betas = jnp.asarray(dataset["betas"])    # [10]
        style = jnp.asarray(dataset["style"])    # [T, F]

        # prepare_for_fitting preprocessing (plain-JAX glue).
        depth = depth * mask
        rgb = rgb * mask[..., None]

        # Biggest perf lever (bandwidth-bound copy): optionally store the big
        # image streams in a narrower dtype (e.g. jnp.bfloat16) -> ~2x fewer
        # HBM bytes on every forward.  Off by default so output dtypes/values
        # match the original module exactly.
        if image_dtype is not None:
            rgb = rgb.astype(image_dtype)
            normal = normal.astype(image_dtype)
            depth = depth.astype(image_dtype)
            mask = mask.astype(image_dtype)
        self.image_dtype = image_dtype

        self.T, self.H, self.W = int(rgb.shape[0]), int(rgb.shape[1]), int(rgb.shape[2])
        self.J = int(pose.shape[1])
        self.F = int(style.shape[-1])
        T, H, W, J, F = self.T, self.H, self.W, self.J, self.F

        # Big per-frame tensors, flattened ONCE to [T, D]: the kernel gathers
        # them with direct HBM->HBM row DMAs -- images never touch VMEM, so
        # this stays safe on v7x's 64 MiB VMEM at any image size.
        self._rgb_flat = rgb.reshape(T, H * W * 3)
        self._normal_flat = normal.reshape(T, H * W * 3)
        self._mask_flat = mask.reshape(T, H * W)
        self._depth_flat = depth.reshape(T, H * W)

        self.K_list = K
        self.betas = betas
        self.style_feature = style

        # nn.Parameter equivalents (kept un-packed so optimizer updates are
        # reflected; the small packed stream below is rebuilt only if they
        # change).
        self.pose_base_list = pose[:, :1]
        self.pose_rest_list = pose[:, 1:]
        self.global_trans_list = trans

        # registered buffers
        self.pose_list_original = pose
        self.global_trans_list_original = trans

        self.balance = balance
        # TODO(synk): KDE-based view-balanced selection_prob (axangle2mat /
        # euler2mat / mat2axangle + sklearn KernelDensity) is host-side
        # preprocessing with no Pallas equivalent; fall back to uniform
        # selection probabilities.
        self.selection_prob = jnp.ones((T,), jnp.float32) / T

        # ---- small packed stream layout:
        #   [pose_base(3) | pose_rest(3*(J-1)) | trans(3) | K(9) | style(F) | pad]
        # Static part (K, style, lane pad to a multiple of 128) hoisted here.
        self._small_sizes = [3, (J - 1) * 3, 3, 9, F]
        self._small_dtypes = [pose.dtype, pose.dtype, trans.dtype, K.dtype, style.dtype]
        p_total = sum(self._small_sizes)
        self._small_p_pad = ((p_total + 127) // 128) * 128
        static_part = jnp.concatenate(
            [K.reshape(T, 9).astype(jnp.float32),
             style.reshape(T, F).astype(jnp.float32)], axis=1)
        pad = self._small_p_pad - p_total
        if pad:
            static_part = jnp.concatenate(
                [static_part, jnp.zeros((T, pad), jnp.float32)], axis=1)
        self._small_static = static_part
        self._small_cache = None  # (param identities, packed array)

    # ---- original-shape views (data stored once, flattened) ----------------
    @property
    def rgb_list(self):
        return self._rgb_flat.reshape(self.T, self.H, self.W, 3)

    @property
    def normal_list(self):
        return self._normal_flat.reshape(self.T, self.H, self.W, 3)

    @property
    def mask_list(self):
        return self._mask_flat.reshape(self.T, self.H, self.W)

    @property
    def depth_list(self):
        return self._depth_flat.reshape(self.T, self.H, self.W)

    @property
    def total_t(self):
        return self.T

    @property
    def pose_list(self):
        return jnp.concatenate([self.pose_base_list, self.pose_rest_list], axis=1)

    @property
    def pose_diff(self):
        return (self.pose_list - self.pose_list_original,
                self.global_trans_list - self.global_trans_list_original)

    # ---- small-tensor packing (cached; only trainables are re-packed) ------
    def _packed_small(self):
        params = (self.pose_base_list, self.pose_rest_list, self.global_trans_list)
        if (self._small_cache is not None
                and all(a is b for a, b in zip(self._small_cache[0], params))):
            return self._small_cache[1]
        T, J = self.T, self.J
        dyn = jnp.concatenate(
            [self.pose_base_list.reshape(T, 3).astype(jnp.float32),
             self.pose_rest_list.reshape(T, (J - 1) * 3).astype(jnp.float32),
             self.global_trans_list.reshape(T, 3).astype(jnp.float32)], axis=1)
        packed = jnp.concatenate([dyn, self._small_static], axis=1)
        self._small_cache = (params, packed)
        return packed

    # ---- forward ------------------------------------------------------------
    def forward(self, N=None, continuous=False, index=None, key=None,
                return_index=False, force_uniform=False):
        if index is not None:
            t = jnp.asarray(index, dtype=jnp.int32).reshape(-1)
        else:
            assert N is not None
            if N == self.T and not self.balance:
                t = jnp.arange(N, dtype=jnp.int32)
            elif continuous and N > 1:
                assert key is not None
                hi = max(self.T - N, 1)  # guard the N == T edge case
                t0 = jax.random.randint(key, (), 0, hi)
                t = jnp.minimum(t0 + jnp.arange(N), self.T - 1).astype(jnp.int32)
            else:
                assert key is not None
                prob = (jnp.ones((self.T,), jnp.float32) / self.T
                        if force_uniform else self.selection_prob)
                t = jax.random.choice(key, self.T, shape=(N,), p=prob).astype(jnp.int32)
        if return_index:
            return t

        n = int(t.shape[0])
        H, W, J, F = self.H, self.W, self.J, self.F

        packed = self._packed_small()
        outs = _pallas_gather(
            t,
            [self._rgb_flat, self._normal_flat, self._mask_flat,
             self._depth_flat, packed],
        )
        rgb_f, nrm_f, msk_f, dpt_f, small_o = outs

        gt_rgb = rgb_f.reshape(n, H, W, 3)
        gt_normal = nrm_f.reshape(n, H, W, 3)
        gt_mask = msk_f.reshape(n, H, W)
        gt_depth = dpt_f.reshape(n, H, W)

        pieces, off = [], 0
        for s, dt in zip(self._small_sizes, self._small_dtypes):
            pieces.append(small_o[:, off:off + s].astype(dt))
            off += s
        pose_base = pieces[0].reshape(n, 1, 3)
        pose_rest = pieces[1].reshape(n, J - 1, 3)
        global_trans = pieces[2].reshape(n, 3)
        Kmat = pieces[3].reshape(n, 3, 3)
        style = pieces[4].reshape(n, F)

        return (gt_rgb, gt_mask, gt_normal, gt_depth, Kmat,
                pose_base, pose_rest, global_trans, t, style)


# ----------------------------------------------------------------------------
# Main: deterministic synthetic dataset, run, verify, print KERNEL_OK
# ----------------------------------------------------------------------------
if __name__ == "__main__":
    T, H, W, J, F = 8, 16, 16, 24, 32
    key = jax.random.PRNGKey(0)
    ks = jax.random.split(key, 9)

    dataset = {
        "rgb":    jax.random.uniform(ks[0], (T, H, W, 3), jnp.float32),
        "mask":   (jax.random.uniform(ks[1], (T, H, W), jnp.float32) > 0.5
                   ).astype(jnp.float32),
        "normal": jax.random.normal(ks[2], (T, H, W, 3), jnp.float32),
        "depth":  jax.random.uniform(ks[3], (T, H, W), jnp.float32),
        "K":      jax.random.normal(ks[4], (T, 3, 3), jnp.float32),
        "pose":   0.1 * jax.random.normal(ks[5], (T, J, 3), jnp.float32),
        "trans":  jax.random.normal(ks[6], (T, 3), jnp.float32),
        "betas":  jax.random.normal(ks[7], (10,), jnp.float32),
        "style":  jax.random.normal(ks[8], (T, F), jnp.float32),
    }

    provider = RealDataOptimizablePoseProviderPoseStyle(dataset, balance=True)

    # ---- deterministic index path (duplicate index + odd N -> exercises the
    #      (parallel, arbitrary) grid split and the clamped tail step) ----
    t = jnp.array([3, 0, 5, 2, 3], dtype=jnp.int32)  # N = 5
    outs = provider.forward(index=t)
    outs = jax.tree_util.tree_map(jax.block_until_ready, outs)

    refs = (
        provider.rgb_list[t], provider.mask_list[t], provider.normal_list[t],
        provider.depth_list[t], provider.K_list[t], provider.pose_base_list[t],
        provider.pose_rest_list[t], provider.global_trans_list[t],
        t, provider.style_feature[t],
    )
    for got, want in zip(outs, refs):
        assert got.shape == want.shape, (got.shape, want.shape)
        assert got.dtype == want.dtype, (got.dtype, want.dtype)
        assert jnp.allclose(got, want), "mismatch vs reference gather"

    # ---- single-row path (single-core grid, depth=1) ----
    outs1 = provider.forward(index=jnp.array([6], dtype=jnp.int32))
    outs1 = jax.tree_util.tree_map(jax.block_until_ready, outs1)
    assert jnp.allclose(outs1[0], provider.rgb_list[6:7])
    assert jnp.allclose(outs1[4], provider.K_list[6:7])

    # ---- random sampling path ----
    outs2 = provider.forward(N=3, key=jax.random.PRNGKey(1))
    outs2 = jax.tree_util.tree_map(jax.block_until_ready, outs2)
    t2 = outs2[8]
    assert jnp.allclose(outs2[0], provider.rgb_list[t2])
    assert jnp.allclose(outs2[9], provider.style_feature[t2])

    # ---- continuous path with N == T (guarded randint edge case; even N
    #      exercises full depth-4 pipeline) ----
    outs3 = provider.forward(N=T, continuous=True, key=jax.random.PRNGKey(2))
    outs3 = jax.tree_util.tree_map(jax.block_until_ready, outs3)
    t3 = outs3[8]
    assert jnp.allclose(outs3[3], provider.depth_list[t3])
    assert jnp.allclose(outs3[2], provider.normal_list[t3])

    # ---- opt-in narrow-storage path (bf16 image streams; halves HBM bytes) --
    provider_bf16 = RealDataOptimizablePoseProviderPoseStyle(
        dataset, balance=True, image_dtype=jnp.bfloat16)
    outs4 = provider_bf16.forward(index=t)
    outs4 = jax.tree_util.tree_map(jax.block_until_ready, outs4)
    assert outs4[0].dtype == jnp.bfloat16
    assert jnp.allclose(outs4[0].astype(jnp.float32),
                        provider_bf16.rgb_list[t].astype(jnp.float32))
    assert jnp.allclose(outs4[1].astype(jnp.float32),
                        provider_bf16.mask_list[t].astype(jnp.float32))

    print("KERNEL_OK")
</pallas_src>

<mosaic_0001>
module attributes {stable_mosaic.version = 11 : i64} {
  func.func @kernel(%arg0: i32, %arg1: i32, %arg2: memref<5xi32, #tpu.memory_space<smem>>, %arg3: memref<8x768xf32, #tpu.memory_space<any>>, %arg4: memref<8x768xf32, #tpu.memory_space<any>>, %arg5: memref<8x256xf32, #tpu.memory_space<any>>, %arg6: memref<8x256xf32, #tpu.memory_space<any>>, %arg7: memref<8x128xf32, #tpu.memory_space<any>>, %arg8: memref<5x768xf32, #tpu.memory_space<any>>, %arg9: memref<5x768xf32, #tpu.memory_space<any>>, %arg10: memref<5x256xf32, #tpu.memory_space<any>>, %arg11: memref<5x256xf32, #tpu.memory_space<any>>, %arg12: memref<5x128xf32, #tpu.memory_space<any>>, %arg13: memref<3x5x!tpu.dma_semaphore, #tpu.memory_space<semaphore_mem>>) attributes {dimension_semantics = [#tpu.dimension_semantics<parallel>, #tpu.dimension_semantics<arbitrary>], iteration_bounds = array<i64: 2, 3>, scalar_prefetch = 1 : i64, scratch_operands = 1 : i64, tpu.core_type = #tpu.core_type<tc>, window_params = [{}, {}, {}, {}, {}, {}, {}, {}, {}, {}]} {
    %c0_i32 = arith.constant 0 : i32
    %0 = arith.cmpi eq, %arg1, %c0_i32 : i32
    %1 = arith.extui %0 : i1 to i32
    %c0_i32_0 = arith.constant 0 : i32
    %2 = arith.cmpi ne, %1, %c0_i32_0 : i32
    scf.if %2 {
      %c3_i32_31 = arith.constant 3 : i32
      %37 = arith.muli %arg0, %c3_i32_31 : i32
      %c0_i32_32 = arith.constant 0 : i32
      %38 = arith.addi %37, %c0_i32_32 : i32
      %c4_i32_33 = arith.constant 4 : i32
      %39 = arith.minsi %38, %c4_i32_33 : i32
      %40 = arith.index_cast %39 : i32 to index
      %41 = memref.load %arg2[%40] : memref<5xi32, #tpu.memory_space<smem>>
      %c0_i32_34 = arith.constant 0 : i32
      %c0_i32_35 = arith.constant 0 : i32
      %c0_i32_36 = arith.constant 0 : i32
      %42 = tpu.memref_slice %arg3[%41, %c0_i32_36] : memref<8x768xf32, #tpu.memory_space<any>> -> memref<1x768xf32, #tpu.memory_space<any>>
      %c0_i32_37 = arith.constant 0 : i32
      %43 = tpu.memref_slice %arg8[%39, %c0_i32_37] : memref<5x768xf32, #tpu.memory_space<any>> -> memref<1x768xf32, #tpu.memory_space<any>>
      %44 = tpu.memref_slice %arg13[%c0_i32_34, %c0_i32_35] : memref<3x5x!tpu.dma_semaphore, #tpu.memory_space<semaphore_mem>> -> memref<1x1x!tpu.dma_semaphore, #tpu.memory_space<semaphore_mem>>
      %45 = tpu.memref_squeeze %44 : memref<1x1x!tpu.dma_semaphore, #tpu.memory_space<semaphore_mem>> -> memref<!tpu.dma_semaphore, #tpu.memory_space<semaphore_mem>>
      tpu.enqueue_dma source(%42 : memref<1x768xf32, #tpu.memory_space<any>>) target(%43 : memref<1x768xf32, #tpu.memory_space<any>>) target_semaphore(%45 : memref<!tpu.dma_semaphore, #tpu.memory_space<semaphore_mem>>)
      %c0_i32_38 = arith.constant 0 : i32
      %c1_i32_39 = arith.constant 1 : i32
      %c0_i32_40 = arith.constant 0 : i32
      %46 = tpu.memref_slice %arg4[%41, %c0_i32_40] : memref<8x768xf32, #tpu.memory_space<any>> -> memref<1x768xf32, #tpu.memory_space<any>>
      %c0_i32_41 = arith.constant 0 : i32
      %47 = tpu.memref_slice %arg9[%39, %c0_i32_41] : memref<5x768xf32, #tpu.memory_space<any>> -> memref<1x768xf32, #tpu.memory_space<any>>
      %48 = tpu.memref_slice %arg13[%c0_i32_38, %c1_i32_39] : memref<3x5x!tpu.dma_semaphore, #tpu.memory_space<semaphore_mem>> -> memref<1x1x!tpu.dma_semaphore, #tpu.memory_space<semaphore_mem>>
      %49 = tpu.memref_squeeze %48 : memref<1x1x!tpu.dma_semaphore, #tpu.memory_space<semaphore_mem>> -> memref<!tpu.dma_semaphore, #tpu.memory_space<semaphore_mem>>
      tpu.enqueue_dma source(%46 : memref<1x768xf32, #tpu.memory_space<any>>) target(%47 : memref<1x768xf32, #tpu.memory_space<any>>) target_semaphore(%49 : memref<!tpu.dma_semaphore, #tpu.memory_space<semaphore_mem>>)
      %c0_i32_42 = arith.constant 0 : i32
      %c2_i32_43 = arith.constant 2 : i32
      %c0_i32_44 = arith.constant 0 : i32
      %50 = tpu.memref_slice %arg5[%41, %c0_i32_44] : memref<8x256xf32, #tpu.memory_space<any>> -> memref<1x256xf32, #tpu.memory_space<any>>
      %c0_i32_45 = arith.constant 0 : i32
      %51 = tpu.memref_slice %arg10[%39, %c0_i32_45] : memref<5x256xf32, #tpu.memory_space<any>> -> memref<1x256xf32, #tpu.memory_space<any>>
      %52 = tpu.memref_slice %arg13[%c0_i32_42, %c2_i32_43] : memref<3x5x!tpu.dma_semaphore, #tpu.memory_space<semaphore_mem>> -> memref<1x1x!tpu.dma_semaphore, #tpu.memory_space<semaphore_mem>>
      %53 = tpu.memref_squeeze %52 : memref<1x1x!tpu.dma_semaphore, #tpu.memory_space<semaphore_mem>> -> memref<!tpu.dma_semaphore, #tpu.memory_space<semaphore_mem>>
      tpu.enqueue_dma source(%50 : memref<1x256xf32, #tpu.memory_space<any>>) target(%51 : memref<1x256xf32, #tpu.memory_space<any>>) target_semaphore(%53 : memref<!tpu.dma_semaphore, #tpu.memory_space<semaphore_mem>>)
      %c0_i32_46 = arith.constant 0 : i32
      %c3_i32_47 = arith.constant 3 : i32
      %c0_i32_48 = arith.constant 0 : i32
      %54 = tpu.memref_slice %arg6[%41, %c0_i32_48] : memref<8x256xf32, #tpu.memory_space<any>> -> memref<1x256xf32, #tpu.memory_space<any>>
      %c0_i32_49 = arith.constant 0 : i32
      %55 = tpu.memref_slice %arg11[%39, %c0_i32_49] : memref<5x256xf32, #tpu.memory_space<any>> -> memref<1x256xf32, #tpu.memory_space<any>>
      %56 = tpu.memref_slice %arg13[%c0_i32_46, %c3_i32_47] : memref<3x5x!tpu.dma_semaphore, #tpu.memory_space<semaphore_mem>> -> memref<1x1x!tpu.dma_semaphore, #tpu.memory_space<semaphore_mem>>
      %57 = tpu.memref_squeeze %56 : memref<1x1x!tpu.dma_semaphore, #tpu.memory_space<semaphore_mem>> -> memref<!tpu.dma_semaphore, #tpu.memory_space<semaphore_mem>>
      tpu.enqueue_dma source(%54 : memref<1x256xf32, #tpu.memory_space<any>>) target(%55 : memref<1x256xf32, #tpu.memory_space<any>>) target_semaphore(%57 : memref<!tpu.dma_semaphore, #tpu.memory_space<semaphore_mem>>)
      %c0_i32_50 = arith.constant 0 : i32
      %c4_i32_51 = arith.constant 4 : i32
      %c0_i32_52 = arith.constant 0 : i32
      %58 = tpu.memref_slice %arg7[%41, %c0_i32_52] : memref<8x128xf32, #tpu.memory_space<any>> -> memref<1x128xf32, #tpu.memory_space<any>>
      %c0_i32_53 = arith.constant 0 : i32
      %59 = tpu.memref_slice %arg12[%39, %c0_i32_53] : memref<5x128xf32, #tpu.memory_space<any>> -> memref<1x128xf32, #tpu.memory_space<any>>
      %60 = tpu.memref_slice %arg13[%c0_i32_50, %c4_i32_51] : memref<3x5x!tpu.dma_semaphore, #tpu.memory_space<semaphore_mem>> -> memref<1x1x!tpu.dma_semaphore, #tpu.memory_space<semaphore_mem>>
      %61 = tpu.memref_squeeze %60 : memref<1x1x!tpu.dma_semaphore, #tpu.memory_space<semaphore_mem>> -> memref<!tpu.dma_semaphore, #tpu.memory_space<semaphore_mem>>
      tpu.enqueue_dma source(%58 : memref<1x128xf32, #tpu.memory_space<any>>) target(%59 : memref<1x128xf32, #tpu.memory_space<any>>) target_semaphore(%61 : memref<!tpu.dma_semaphore, #tpu.memory_space<semaphore_mem>>)
      %c3_i32_54 = arith.constant 3 : i32
      %62 = arith.muli %arg0, %c3_i32_54 : i32
      %c1_i32_55 = arith.constant 1 : i32
      %63 = arith.addi %62, %c1_i32_55 : i32
      %c4_i32_56 = arith.constant 4 : i32
      %64 = arith.minsi %63, %c4_i32_56 : i32
      %65 = arith.index_cast %64 : i32 to index
      %66 = memref.load %arg2[%65] : memref<5xi32, #tpu.memory_space<smem>>
      %c1_i32_57 = arith.constant 1 : i32
      %c0_i32_58 = arith.constant 0 : i32
      %c0_i32_59 = arith.constant 0 : i32
      %67 = tpu.memref_slice %arg3[%66, %c0_i32_59] : memref<8x768xf32, #tpu.memory_space<any>> -> memref<1x768xf32, #tpu.memory_space<any>>
      %c0_i32_60 = arith.constant 0 : i32
      %68 = tpu.memref_slice %arg8[%64, %c0_i32_60] : memref<5x768xf32, #tpu.memory_space<any>> -> memref<1x768xf32, #tpu.memory_space<any>>
      %69 = tpu.memref_slice %arg13[%c1_i32_57, %c0_i32_58] : memref<3x5x!tpu.dma_semaphore, #tpu.memory_space<semaphore_mem>> -> memref<1x1x!tpu.dma_semaphore, #tpu.memory_space<semaphore_mem>>
      %70 = tpu.memref_squeeze %69 : memref<1x1x!tpu.dma_semaphore, #tpu.memory_space<semaphore_mem>> -> memref<!tpu.dma_semaphore, #tpu.memory_space<semaphore_mem>>
      tpu.enqueue_dma source(%67 : memref<1x768xf32, #tpu.memory_space<any>>) target(%68 : memref<1x768xf32, #tpu.memory_space<any>>) target_semaphore(%70 : memref<!tpu.dma_semaphore, #tpu.memory_space<semaphore_mem>>)
      %c1_i32_61 = arith.constant 1 : i32
      %c1_i32_62 = arith.constant 1 : i32
      %c0_i32_63 = arith.constant 0 : i32
      %71 = tpu.memref_slice %arg4[%66, %c0_i32_63] : memref<8x768xf32, #tpu.memory_space<any>> -> memref<1x768xf32, #tpu.memory_space<any>>
      %c0_i32_64 = arith.constant 0 : i32
      %72 = tpu.memref_slice %arg9[%64, %c0_i32_64] : memref<5x768xf32, #tpu.memory_space<any>> -> memref<1x768xf32, #tpu.memory_space<any>>
      %73 = tpu.memref_slice %arg13[%c1_i32_61, %c1_i32_62] : memref<3x5x!tpu.dma_semaphore, #tpu.memory_space<semaphore_mem>> -> memref<1x1x!tpu.dma_semaphore, #tpu.memory_space<semaphore_mem>>
      %74 = tpu.memref_squeeze %73 : memref<1x1x!tpu.dma_semaphore, #tpu.memory_space<semaphore_mem>> -> memref<!tpu.dma_semaphore, #tpu.memory_space<semaphore_mem>>
      tpu.enqueue_dma source(%71 : memref<1x768xf32, #tpu.memory_space<any>>) target(%72 : memref<1x768xf32, #tpu.memory_space<any>>) target_semaphore(%74 : memref<!tpu.dma_semaphore, #tpu.memory_space<semaphore_mem>>)
      %c1_i32_65 = arith.constant 1 : i32
      %c2_i32_66 = arith.constant 2 : i32
      %c0_i32_67 = arith.constant 0 : i32
      %75 = tpu.memref_slice %arg5[%66, %c0_i32_67] : memref<8x256xf32, #tpu.memory_space<any>> -> memref<1x256xf32, #tpu.memory_space<any>>
      %c0_i32_68 = arith.constant 0 : i32
      %76 = tpu.memref_slice %arg10[%64, %c0_i32_68] : memref<5x256xf32, #tpu.memory_space<any>> -> memref<1x256xf32, #tpu.memory_space<any>>
      %77 = tpu.memref_slice %arg13[%c1_i32_65, %c2_i32_66] : memref<3x5x!tpu.dma_semaphore, #tpu.memory_space<semaphore_mem>> -> memref<1x1x!tpu.dma_semaphore, #tpu.memory_space<semaphore_mem>>
      %78 = tpu.memref_squeeze %77 : memref<1x1x!tpu.dma_semaphore, #tpu.memory_space<semaphore_mem>> -> memref<!tpu.dma_semaphore, #tpu.memory_space<semaphore_mem>>
      tpu.enqueue_dma source(%75 : memref<1x256xf32, #tpu.memory_space<any>>) target(%76 : memref<1x256xf32, #tpu.memory_space<any>>) target_semaphore(%78 : memref<!tpu.dma_semaphore, #tpu.memory_space<semaphore_mem>>)
      %c1_i32_69 = arith.constant 1 : i32
      %c3_i32_70 = arith.constant 3 : i32
      %c0_i32_71 = arith.constant 0 : i32
      %79 = tpu.memref_slice %arg6[%66, %c0_i32_71] : memref<8x256xf32, #tpu.memory_space<any>> -> memref<1x256xf32, #tpu.memory_space<any>>
      %c0_i32_72 = arith.constant 0 : i32
      %80 = tpu.memref_slice %arg11[%64, %c0_i32_72] : memref<5x256xf32, #tpu.memory_space<any>> -> memref<1x256xf32, #tpu.memory_space<any>>
      %81 = tpu.memref_slice %arg13[%c1_i32_69, %c3_i32_70] : memref<3x5x!tpu.dma_semaphore, #tpu.memory_space<semaphore_mem>> -> memref<1x1x!tpu.dma_semaphore, #tpu.memory_space<semaphore_mem>>
      %82 = tpu.memref_squeeze %81 : memref<1x1x!tpu.dma_semaphore, #tpu.memory_space<semaphore_mem>> -> memref<!tpu.dma_semaphore, #tpu.memory_space<semaphore_mem>>
      tpu.enqueue_dma source(%79 : memref<1x256xf32, #tpu.memory_space<any>>) target(%80 : memref<1x256xf32, #tpu.memory_space<any>>) target_semaphore(%82 : memref<!tpu.dma_semaphore, #tpu.memory_space<semaphore_mem>>)
      %c1_i32_73 = arith.constant 1 : i32
      %c4_i32_74 = arith.constant 4 : i32
      %c0_i32_75 = arith.constant 0 : i32
      %83 = tpu.memref_slice %arg7[%66, %c0_i32_75] : memref<8x128xf32, #tpu.memory_space<any>> -> memref<1x128xf32, #tpu.memory_space<any>>
      %c0_i32_76 = arith.constant 0 : i32
      %84 = tpu.memref_slice %arg12[%64, %c0_i32_76] : memref<5x128xf32, #tpu.memory_space<any>> -> memref<1x128xf32, #tpu.memory_space<any>>
      %85 = tpu.memref_slice %arg13[%c1_i32_73, %c4_i32_74] : memref<3x5x!tpu.dma_semaphore, #tpu.memory_space<semaphore_mem>> -> memref<1x1x!tpu.dma_semaphore, #tpu.memory_space<semaphore_mem>>
      %86 = tpu.memref_squeeze %85 : memref<1x1x!tpu.dma_semaphore, #tpu.memory_space<semaphore_mem>> -> memref<!tpu.dma_semaphore, #tpu.memory_space<semaphore_mem>>
      tpu.enqueue_dma source(%83 : memref<1x128xf32, #tpu.memory_space<any>>) target(%84 : memref<1x128xf32, #tpu.memory_space<any>>) target_semaphore(%86 : memref<!tpu.dma_semaphore, #tpu.memory_space<semaphore_mem>>)
      %c3_i32_77 = arith.constant 3 : i32
      %87 = arith.muli %arg0, %c3_i32_77 : i32
      %c2_i32_78 = arith.constant 2 : i32
      %88 = arith.addi %87, %c2_i32_78 : i32
      %c4_i32_79 = arith.constant 4 : i32
      %89 = arith.minsi %88, %c4_i32_79 : i32
      %90 = arith.index_cast %89 : i32 to index
      %91 = memref.load %arg2[%90] : memref<5xi32, #tpu.memory_space<smem>>
      %c2_i32_80 = arith.constant 2 : i32
      %c0_i32_81 = arith.constant 0 : i32
      %c0_i32_82 = arith.constant 0 : i32
      %92 = tpu.memref_slice %arg3[%91, %c0_i32_82] : memref<8x768xf32, #tpu.memory_space<any>> -> memref<1x768xf32, #tpu.memory_space<any>>
      %c0_i32_83 = arith.constant 0 : i32
      %93 = tpu.memref_slice %arg8[%89, %c0_i32_83] : memref<5x768xf32, #tpu.memory_space<any>> -> memref<1x768xf32, #tpu.memory_space<any>>
      %94 = tpu.memref_slice %arg13[%c2_i32_80, %c0_i32_81] : memref<3x5x!tpu.dma_semaphore, #tpu.memory_space<semaphore_mem>> -> memref<1x1x!tpu.dma_semaphore, #tpu.memory_space<semaphore_mem>>
      %95 = tpu.memref_squeeze %94 : memref<1x1x!tpu.dma_semaphore, #tpu.memory_space<semaphore_mem>> -> memref<!tpu.dma_semaphore, #tpu.memory_space<semaphore_mem>>
      tpu.enqueue_dma source(%92 : memref<1x768xf32, #tpu.memory_space<any>>) target(%93 : memref<1x768xf32, #tpu.memory_space<any>>) target_semaphore(%95 : memref<!tpu.dma_semaphore, #tpu.memory_space<semaphore_mem>>)
      %c2_i32_84 = arith.constant 2 : i32
      %c1_i32_85 = arith.constant 1 : i32
      %c0_i32_86 = arith.constant 0 : i32
      %96 = tpu.memref_slice %arg4[%91, %c0_i32_86] : memref<8x768xf32, #tpu.memory_space<any>> -> memref<1x768xf32, #tpu.memory_space<any>>
      %c0_i32_87 = arith.constant 0 : i32
      %97 = tpu.memref_slice %arg9[%89, %c0_i32_87] : memref<5x768xf32, #tpu.memory_space<any>> -> memref<1x768xf32, #tpu.memory_space<any>>
      %98 = tpu.memref_slice %arg13[%c2_i32_84, %c1_i32_85] : memref<3x5x!tpu.dma_semaphore, #tpu.memory_space<semaphore_mem>> -> memref<1x1x!tpu.dma_semaphore, #tpu.memory_space<semaphore_mem>>
      %99 = tpu.memref_squeeze %98 : memref<1x1x!tpu.dma_semaphore, #tpu.memory_space<semaphore_mem>> -> memref<!tpu.dma_semaphore, #tpu.memory_space<semaphore_mem>>
      tpu.enqueue_dma source(%96 : memref<1x768xf32, #tpu.memory_space<any>>) target(%97 : memref<1x768xf32, #tpu.memory_space<any>>) target_semaphore(%99 : memref<!tpu.dma_semaphore, #tpu.memory_space<semaphore_mem>>)
      %c2_i32_88 = arith.constant 2 : i32
      %c2_i32_89 = arith.constant 2 : i32
      %c0_i32_90 = arith.constant 0 : i32
      %100 = tpu.memref_slice %arg5[%91, %c0_i32_90] : memref<8x256xf32, #tpu.memory_space<any>> -> memref<1x256xf32, #tpu.memory_space<any>>
      %c0_i32_91 = arith.constant 0 : i32
      %101 = tpu.memref_slice %arg10[%89, %c0_i32_91] : memref<5x256xf32, #tpu.memory_space<any>> -> memref<1x256xf32, #tpu.memory_space<any>>
      %102 = tpu.memref_slice %arg13[%c2_i32_88, %c2_i32_89] : memref<3x5x!tpu.dma_semaphore, #tpu.memory_space<semaphore_mem>> -> memref<1x1x!tpu.dma_semaphore, #tpu.memory_space<semaphore_mem>>
      %103 = tpu.memref_squeeze %102 : memref<1x1x!tpu.dma_semaphore, #tpu.memory_space<semaphore_mem>> -> memref<!tpu.dma_semaphore, #tpu.memory_space<semaphore_mem>>
      tpu.enqueue_dma source(%100 : memref<1x256xf32, #tpu.memory_space<any>>) target(%101 : memref<1x256xf32, #tpu.memory_space<any>>) target_semaphore(%103 : memref<!tpu.dma_semaphore, #tpu.memory_space<semaphore_mem>>)
      %c2_i32_92 = arith.constant 2 : i32
      %c3_i32_93 = arith.constant 3 : i32
      %c0_i32_94 = arith.constant 0 : i32
      %104 = tpu.memref_slice %arg6[%91, %c0_i32_94] : memref<8x256xf32, #tpu.memory_space<any>> -> memref<1x256xf32, #tpu.memory_space<any>>
      %c0_i32_95 = arith.constant 0 : i32
      %105 = tpu.memref_slice %arg11[%89, %c0_i32_95] : memref<5x256xf32, #tpu.memory_space<any>> -> memref<1x256xf32, #tpu.memory_space<any>>
      %106 = tpu.memref_slice %arg13[%c2_i32_92, %c3_i32_93] : memref<3x5x!tpu.dma_semaphore, #tpu.memory_space<semaphore_mem>> -> memref<1x1x!tpu.dma_semaphore, #tpu.memory_space<semaphore_mem>>
      %107 = tpu.memref_squeeze %106 : memref<1x1x!tpu.dma_semaphore, #tpu.memory_space<semaphore_mem>> -> memref<!tpu.dma_semaphore, #tpu.memory_space<semaphore_mem>>
      tpu.enqueue_dma source(%104 : memref<1x256xf32, #tpu.memory_space<any>>) target(%105 : memref<1x256xf32, #tpu.memory_space<any>>) target_semaphore(%107 : memref<!tpu.dma_semaphore, #tpu.memory_space<semaphore_mem>>)
      %c2_i32_96 = arith.constant 2 : i32
      %c4_i32_97 = arith.constant 4 : i32
      %c0_i32_98 = arith.constant 0 : i32
      %108 = tpu.memref_slice %arg7[%91, %c0_i32_98] : memref<8x128xf32, #tpu.memory_space<any>> -> memref<1x128xf32, #tpu.memory_space<any>>
      %c0_i32_99 = arith.constant 0 : i32
      %109 = tpu.memref_slice %arg12[%89, %c0_i32_99] : memref<5x128xf32, #tpu.memory_space<any>> -> memref<1x128xf32, #tpu.memory_space<any>>
      %110 = tpu.memref_slice %arg13[%c2_i32_96, %c4_i32_97] : memref<3x5x!tpu.dma_semaphore, #tpu.memory_space<semaphore_mem>> -> memref<1x1x!tpu.dma_semaphore, #tpu.memory_space<semaphore_mem>>
      %111 = tpu.memref_squeeze %110 : memref<1x1x!tpu.dma_semaphore, #tpu.memory_space<semaphore_mem>> -> memref<!tpu.dma_semaphore, #tpu.memory_space<semaphore_mem>>
      tpu.enqueue_dma source(%108 : memref<1x128xf32, #tpu.memory_space<any>>) target(%109 : memref<1x128xf32, #tpu.memory_space<any>>) target_semaphore(%111 : memref<!tpu.dma_semaphore, #tpu.memory_space<semaphore_mem>>)
    } else {
    }
    %c3_i32 = arith.constant 3 : i32
    %c0_i32_1 = arith.constant 0 : i32
    %3 = arith.cmpi eq, %c3_i32, %c0_i32_1 : i32
    %c1_i32 = arith.constant 1 : i32
    %4 = arith.select %3, %c1_i32, %c3_i32 : i32
    %5 = arith.remsi %arg1, %4 : i32
    %c0_i32_2 = arith.constant 0 : i32
    %6 = arith.cmpi ne, %5, %c0_i32_2 : i32
    %c0_i32_3 = arith.constant 0 : i32
    %7 = arith.cmpi slt, %5, %c0_i32_3 : i32
    %c0_i32_4 = arith.constant 0 : i32
    %8 = arith.cmpi slt, %4, %c0_i32_4 : i32
    %9 = arith.xori %7, %8 : i1
    %10 = arith.andi %9, %6 : i1
    %11 = arith.addi %5, %4 : i32
    %12 = arith.select %10, %11, %5 : i32
    %c0_i32_5 = arith.constant 0 : i32
    %c0_i32_6 = arith.constant 0 : i32
    %c0_i32_7 = arith.constant 0 : i32
    %13 = tpu.memref_slice %arg3[%c0_i32_6, %c0_i32_7] : memref<8x768xf32, #tpu.memory_space<any>> -> memref<1x768xf32, #tpu.memory_space<any>>
    %c0_i32_8 = arith.constant 0 : i32
    %c0_i32_9 = arith.constant 0 : i32
    %14 = tpu.memref_slice %arg8[%c0_i32_8, %c0_i32_9] : memref<5x768xf32, #tpu.memory_space<any>> -> memref<1x768xf32, #tpu.memory_space<any>>
    %15 = tpu.memref_slice %arg13[%12, %c0_i32_5] : memref<3x5x!tpu.dma_semaphore, #tpu.memory_space<semaphore_mem>> -> memref<1x1x!tpu.dma_semaphore, #tpu.memory_space<semaphore_mem>>
    %16 = tpu.memref_squeeze %15 : memref<1x1x!tpu.dma_semaphore, #tpu.memory_space<semaphore_mem>> -> memref<!tpu.dma_semaphore, #tpu.memory_space<semaphore_mem>>
    tpu.wait_dma2 semaphore(%16 : memref<!tpu.dma_semaphore, #tpu.memory_space<semaphore_mem>>) src(%13 : memref<1x768xf32, #tpu.memory_space<any>>) dst(%14 : memref<1x768xf32, #tpu.memory_space<any>>)
    %c1_i32_10 = arith.constant 1 : i32
    %c0_i32_11 = arith.constant 0 : i32
    %c0_i32_12 = arith.constant 0 : i32
    %17 = tpu.memref_slice %arg4[%c0_i32_11, %c0_i32_12] : memref<8x768xf32, #tpu.memory_space<any>> -> memref<1x768xf32, #tpu.memory_space<any>>
    %c0_i32_13 = arith.constant 0 : i32
    %c0_i32_14 = arith.constant 0 : i32
    %18 = tpu.memref_slice %arg9[%c0_i32_13, %c0_i32_14] : memref<5x768xf32, #tpu.memory_space<any>> -> memref<1x768xf32, #tpu.memory_space<any>>
    %19 = tpu.memref_slice %arg13[%12, %c1_i32_10] : memref<3x5x!tpu.dma_semaphore, #tpu.memory_space<semaphore_mem>> -> memref<1x1x!tpu.dma_semaphore, #tpu.memory_space<semaphore_mem>>
    %20 = tpu.memref_squeeze %19 : memref<1x1x!tpu.dma_semaphore, #tpu.memory_space<semaphore_mem>> -> memref<!tpu.dma_semaphore, #tpu.memory_space<semaphore_mem>>
    tpu.wait_dma2 semaphore(%20 : memref<!tpu.dma_semaphore, #tpu.memory_space<semaphore_mem>>) src(%17 : memref<1x768xf32, #tpu.memory_space<any>>) dst(%18 : memref<1x768xf32, #tpu.memory_space<any>>)
    %c2_i32 = arith.constant 2 : i32
    %c0_i32_15 = arith.constant 0 : i32
    %c0_i32_16 = arith.constant 0 : i32
    %21 = tpu.memref_slice %arg5[%c0_i32_15, %c0_i32_16] : memref<8x256xf32, #tpu.memory_space<any>> -> memref<1x256xf32, #tpu.memory_space<any>>
    %c0_i32_17 = arith.constant 0 : i32
    %c0_i32_18 = arith.constant 0 : i32
    %22 = tpu.memref_slice %arg10[%c0_i32_17, %c0_i32_18] : memref<5x256xf32, #tpu.memory_space<any>> -> memref<1x256xf32, #tpu.memory_space<any>>
    %23 = tpu.memref_slice %arg13[%12, %c2_i32] : memref<3x5x!tpu.dma_semaphore, #tpu.memory_space<semaphore_mem>> -> memref<1x1x!tpu.dma_semaphore, #tpu.memory_space<semaphore_mem>>
    %24 = tpu.memref_squeeze %23 : memref<1x1x!tpu.dma_semaphore, #tpu.memory_space<semaphore_mem>> -> memref<!tpu.dma_semaphore, #tpu.memory_space<semaphore_mem>>
    tpu.wait_dma2 semaphore(%24 : memref<!tpu.dma_semaphore, #tpu.memory_space<semaphore_mem>>) src(%21 : memref<1x256xf32, #tpu.memory_space<any>>) dst(%22 : memref<1x256xf32, #tpu.memory_space<any>>)
    %c3_i32_19 = arith.constant 3 : i32
    %c0_i32_20 = arith.constant 0 : i32
    %c0_i32_21 = arith.constant 0 : i32
    %25 = tpu.memref_slice %arg6[%c0_i32_20, %c0_i32_21] : memref<8x256xf32, #tpu.memory_space<any>> -> memref<1x256xf32, #tpu.memory_space<any>>
    %c0_i32_22 = arith.constant 0 : i32
    %c0_i32_23 = arith.constant 0 : i32
    %26 = tpu.memref_slice %arg11[%c0_i32_22, %c0_i32_23] : memref<5x256xf32, #tpu.memory_space<any>> -> memref<1x256xf32, #tpu.memory_space<any>>
    %27 = tpu.memref_slice %arg13[%12, %c3_i32_19] : memref<3x5x!tpu.dma_semaphore, #tpu.memory_space<semaphore_mem>> -> memref<1x1x!tpu.dma_semaphore, #tpu.memory_space<semaphore_mem>>
    %28 = tpu.memref_squeeze %27 : memref<1x1x!tpu.dma_semaphore, #tpu.memory_space<semaphore_mem>> -> memref<!tpu.dma_semaphore, #tpu.memory_space<semaphore_mem>>
    tpu.wait_dma2 semaphore(%28 : memref<!tpu.dma_semaphore, #tpu.memory_space<semaphore_mem>>) src(%25 : memref<1x256xf32, #tpu.memory_space<any>>) dst(%26 : memref<1x256xf32, #tpu.memory_space<any>>)
    %c4_i32 = arith.constant 4 : i32
    %c0_i32_24 = arith.constant 0 : i32
    %c0_i32_25 = arith.constant 0 : i32
    %29 = tpu.memref_slice %arg7[%c0_i32_24, %c0_i32_25] : memref<8x128xf32, #tpu.memory_space<any>> -> memref<1x128xf32, #tpu.memory_space<any>>
    %c0_i32_26 = arith.constant 0 : i32
    %c0_i32_27 = arith.constant 0 : i32
    %30 = tpu.memref_slice %arg12[%c0_i32_26, %c0_i32_27] : memref<5x128xf32, #tpu.memory_space<any>> -> memref<1x128xf32, #tpu.memory_space<any>>
    %31 = tpu.memref_slice %arg13[%12, %c4_i32] : memref<3x5x!tpu.dma_semaphore, #tpu.memory_space<semaphore_mem>> -> memref<1x1x!tpu.dma_semaphore, #tpu.memory_space<semaphore_mem>>
    %32 = tpu.memref_squeeze %31 : memref<1x1x!tpu.dma_semaphore, #tpu.memory_space<semaphore_mem>> -> memref<!tpu.dma_semaphore, #tpu.memory_space<semaphore_mem>>
    tpu.wait_dma2 semaphore(%32 : memref<!tpu.dma_semaphore, #tpu.memory_space<semaphore_mem>>) src(%29 : memref<1x128xf32, #tpu.memory_space<any>>) dst(%30 : memref<1x128xf32, #tpu.memory_space<any>>)
    %c3_i32_28 = arith.constant 3 : i32
    %33 = arith.addi %arg1, %c3_i32_28 : i32
    %c3_i32_29 = arith.constant 3 : i32
    %34 = arith.cmpi slt, %33, %c3_i32_29 : i32
    %35 = arith.extui %34 : i1 to i32
    %c0_i32_30 = arith.constant 0 : i32
    %36 = arith.cmpi ne, %35, %c0_i32_30 : i32
    scf.if %36 {
      %c3_i32_31 = arith.constant 3 : i32
      %37 = arith.addi %arg1, %c3_i32_31 : i32
      %c3_i32_32 = arith.constant 3 : i32
      %c0_i32_33 = arith.constant 0 : i32
      %38 = arith.cmpi eq, %c3_i32_32, %c0_i32_33 : i32
      %c1_i32_34 = arith.constant 1 : i32
      %39 = arith.select %38, %c1_i32_34, %c3_i32_32 : i32
      %40 = arith.remsi %arg1, %39 : i32
      %c0_i32_35 = arith.constant 0 : i32
      %41 = arith.cmpi ne, %40, %c0_i32_35 : i32
      %c0_i32_36 = arith.constant 0 : i32
      %42 = arith.cmpi slt, %40, %c0_i32_36 : i32
      %c0_i32_37 = arith.constant 0 : i32
      %43 = arith.cmpi slt, %39, %c0_i32_37 : i32
      %44 = arith.xori %42, %43 : i1
      %45 = arith.andi %44, %41 : i1
      %46 = arith.addi %40, %39 : i32
      %47 = arith.select %45, %46, %40 : i32
      %c3_i32_38 = arith.constant 3 : i32
      %48 = arith.muli %arg0, %c3_i32_38 : i32
      %49 = arith.addi %48, %37 : i32
      %c4_i32_39 = arith.constant 4 : i32
      %50 = arith.minsi %49, %c4_i32_39 : i32
      %51 = arith.index_cast %50 : i32 to index
      %52 = memref.load %arg2[%51] : memref<5xi32, #tpu.memory_space<smem>>
      %c0_i32_40 = arith.constant 0 : i32
      %c0_i32_41 = arith.constant 0 : i32
      %53 = tpu.memref_slice %arg3[%52, %c0_i32_41] : memref<8x768xf32, #tpu.memory_space<any>> -> memref<1x768xf32, #tpu.memory_space<any>>
      %c0_i32_42 = arith.constant 0 : i32
      %54 = tpu.memref_slice %arg8[%50, %c0_i32_42] : memref<5x768xf32, #tpu.memory_space<any>> -> memref<1x768xf32, #tpu.memory_space<any>>
      %55 = tpu.memref_slice %arg13[%47, %c0_i32_40] : memref<3x5x!tpu.dma_semaphore, #tpu.memory_space<semaphore_mem>> -> memref<1x1x!tpu.dma_semaphore, #tpu.memory_space<semaphore_mem>>
      %56 = tpu.memref_squeeze %55 : memref<1x1x!tpu.dma_semaphore, #tpu.memory_space<semaphore_mem>> -> memref<!tpu.dma_semaphore, #tpu.memory_space<semaphore_mem>>
      tpu.enqueue_dma source(%53 : memref<1x768xf32, #tpu.memory_space<any>>) target(%54 : memref<1x768xf32, #tpu.memory_space<any>>) target_semaphore(%56 : memref<!tpu.dma_semaphore, #tpu.memory_space<semaphore_mem>>)
      %c1_i32_43 = arith.constant 1 : i32
      %c0_i32_44 = arith.constant 0 : i32
      %57 = tpu.memref_slice %arg4[%52, %c0_i32_44] : memref<8x768xf32, #tpu.memory_space<any>> -> memref<1x768xf32, #tpu.memory_space<any>>
      %c0_i32_45 = arith.constant 0 : i32
      %58 = tpu.memref_slice %arg9[%50, %c0_i32_45] : memref<5x768xf32, #tpu.memory_space<any>> -> memref<1x768xf32, #tpu.memory_space<any>>
      %59 = tpu.memref_slice %arg13[%47, %c1_i32_43] : memref<3x5x!tpu.dma_semaphore, #tpu.memory_space<semaphore_mem>> -> memref<1x1x!tpu.dma_semaphore, #tpu.memory_space<semaphore_mem>>
      %60 = tpu.memref_squeeze %59 : memref<1x1x!tpu.dma_semaphore, #tpu.memory_space<semaphore_mem>> -> memref<!tpu.dma_semaphore, #tpu.memory_space<semaphore_mem>>
      tpu.enqueue_dma source(%57 : memref<1x768xf32, #tpu.memory_space<any>>) target(%58 : memref<1x768xf32, #tpu.memory_space<any>>) target_semaphore(%60 : memref<!tpu.dma_semaphore, #tpu.memory_space<semaphore_mem>>)
      %c2_i32_46 = arith.constant 2 : i32
      %c0_i32_47 = arith.constant 0 : i32
      %61 = tpu.memref_slice %arg5[%52, %c0_i32_47] : memref<8x256xf32, #tpu.memory_space<any>> -> memref<1x256xf32, #tpu.memory_space<any>>
      %c0_i32_48 = arith.constant 0 : i32
      %62 = tpu.memref_slice %arg10[%50, %c0_i32_48] : memref<5x256xf32, #tpu.memory_space<any>> -> memref<1x256xf32, #tpu.memory_space<any>>
      %63 = tpu.memref_slice %arg13[%47, %c2_i32_46] : memref<3x5x!tpu.dma_semaphore, #tpu.memory_space<semaphore_mem>> -> memref<1x1x!tpu.dma_semaphore, #tpu.memory_space<semaphore_mem>>
      %64 = tpu.memref_squeeze %63 : memref<1x1x!tpu.dma_semaphore, #tpu.memory_space<semaphore_mem>> -> memref<!tpu.dma_semaphore, #tpu.memory_space<semaphore_mem>>
      tpu.enqueue_dma source(%61 : memref<1x256xf32, #tpu.memory_space<any>>) target(%62 : memref<1x256xf32, #tpu.memory_space<any>>) target_semaphore(%64 : memref<!tpu.dma_semaphore, #tpu.memory_space<semaphore_mem>>)
      %c3_i32_49 = arith.constant 3 : i32
      %c0_i32_50 = arith.constant 0 : i32
      %65 = tpu.memref_slice %arg6[%52, %c0_i32_50] : memref<8x256xf32, #tpu.memory_space<any>> -> memref<1x256xf32, #tpu.memory_space<any>>
      %c0_i32_51 = arith.constant 0 : i32
      %66 = tpu.memref_slice %arg11[%50, %c0_i32_51] : memref<5x256xf32, #tpu.memory_space<any>> -> memref<1x256xf32, #tpu.memory_space<any>>
      %67 = tpu.memref_slice %arg13[%47, %c3_i32_49] : memref<3x5x!tpu.dma_semaphore, #tpu.memory_space<semaphore_mem>> -> memref<1x1x!tpu.dma_semaphore, #tpu.memory_space<semaphore_mem>>
      %68 = tpu.memref_squeeze %67 : memref<1x1x!tpu.dma_semaphore, #tpu.memory_space<semaphore_mem>> -> memref<!tpu.dma_semaphore, #tpu.memory_space<semaphore_mem>>
      tpu.enqueue_dma source(%65 : memref<1x256xf32, #tpu.memory_space<any>>) target(%66 : memref<1x256xf32, #tpu.memory_space<any>>) target_semaphore(%68 : memref<!tpu.dma_semaphore, #tpu.memory_space<semaphore_mem>>)
      %c4_i32_52 = arith.constant 4 : i32
      %c0_i32_53 = arith.constant 0 : i32
      %69 = tpu.memref_slice %arg7[%52, %c0_i32_53] : memref<8x128xf32, #tpu.memory_space<any>> -> memref<1x128xf32, #tpu.memory_space<any>>
      %c0_i32_54 = arith.constant 0 : i32
      %70 = tpu.memref_slice %arg12[%50, %c0_i32_54] : memref<5x128xf32, #tpu.memory_space<any>> -> memref<1x128xf32, #tpu.memory_space<any>>
      %71 = tpu.memref_slice %arg13[%47, %c4_i32_52] : memref<3x5x!tpu.dma_semaphore, #tpu.memory_space<semaphore_mem>> -> memref<1x1x!tpu.dma_semaphore, #tpu.memory_space<semaphore_mem>>
      %72 = tpu.memref_squeeze %71 : memref<1x1x!tpu.dma_semaphore, #tpu.memory_space<semaphore_mem>> -> memref<!tpu.dma_semaphore, #tpu.memory_space<semaphore_mem>>
      tpu.enqueue_dma source(%69 : memref<1x128xf32, #tpu.memory_space<any>>) target(%70 : memref<1x128xf32, #tpu.memory_space<any>>) target_semaphore(%72 : memref<!tpu.dma_semaphore, #tpu.memory_space<semaphore_mem>>)
    } else {
    }
    return
  }
}

</mosaic_0001>

<llo_original>
// kernel: tpu_custom_call.1
$region0: #{tpu_custom_call.1}
  #allocation0 [shape = 'u32[]', space=smem, size = 0x4, offset = 0x4, fixed_abs, tag = 'smem constant byte address 0x4 - core index']
  #allocation1 [shape = 'u32[144,128]{1,0:T(1,128)}', space=vmem, size = 0x12000, scoped, tag = 'internal scratch']
  #allocation2 [shape = 's32[15]{0}', space=sflag, size = 0x3c, scoped, tag = 'scratch operand']
  #allocation3 [shape = 's32[1]{0}', space=sflag, size = 0x4, scoped, tag = 'scoped memory for tpu_custom_call.1']
  #allocation4 [shape = 'u8[512]{0}', space=smem, size = 0x200, scoped, tag = 'prefetched SMEM operand 0']
  #allocation5 [shape = 's32[]', space=sflag, size = 0x4, offset = 0, fixed_abs, tag = 'sflag constant byte address 0x0 - dummy sync flag']
  #allocation7 [shape = 's32[]', space=sflag, size = 0x4, offset = 0, fixed_abs, tag = 'sflag constant byte address 0x0 - dummy sync flag']
  #allocation9 [shape = 's32[]', space=sflag, size = 0x4, offset = 0, fixed_abs, tag = 'sflag constant byte address 0x0 - dummy sync flag']
  #allocation11 [shape = 's32[]', space=sflag, size = 0x4, offset = 0, fixed_abs, tag = 'sflag constant byte address 0x0 - dummy sync flag']
  #allocation13 [shape = 's32[]', space=sflag, size = 0x4, offset = 0, fixed_abs, tag = 'sflag constant byte address 0x0 - dummy sync flag']
  #allocation14 [shape = 's32[]', space=sflag, size = 0x4, offset = 0, fixed_abs, tag = 'sflag constant byte address 0x0 - dummy sync flag']
  #allocation15 [shape = 'u32[]', space=smem, size = 0x4, offset = 0x44, fixed_abs, tag = 'smem constant byte address 0x44 - assertion arg 0']
  #allocation16 [shape = 'u32[]', space=smem, size = 0x4, offset = 0x48, fixed_abs, tag = 'smem constant byte address 0x48 - assertion arg 1']
  #allocation17 [shape = 's32[]', space=sflag, size = 0x4, offset = 0, fixed_abs, tag = 'sflag constant byte address 0x0 - dummy sync flag']
  #allocation19 [shape = 's32[]', space=sflag, size = 0x4, offset = 0, fixed_abs, tag = 'sflag constant byte address 0x0 - dummy sync flag']
  #allocation21 [shape = 's32[]', space=sflag, size = 0x4, offset = 0, fixed_abs, tag = 'sflag constant byte address 0x0 - dummy sync flag']
  #allocation23 [shape = 's32[]', space=sflag, size = 0x4, offset = 0, fixed_abs, tag = 'sflag constant byte address 0x0 - dummy sync flag']
  #allocation25 [shape = 's32[]', space=sflag, size = 0x4, offset = 0, fixed_abs, tag = 'sflag constant byte address 0x0 - dummy sync flag']
  #allocation26 [shape = 's32[]', space=sflag, size = 0x4, offset = 0, fixed_abs, tag = 'sflag constant byte address 0x0 - dummy sync flag']
  #allocation27 [shape = 's32[]', space=sflag, size = 0x4, offset = 0, fixed_abs, tag = 'sflag constant byte address 0x0 - dummy sync flag']
  #allocation29 [shape = 's32[]', space=sflag, size = 0x4, offset = 0, fixed_abs, tag = 'sflag constant byte address 0x0 - dummy sync flag']
  #allocation31 [shape = 's32[]', space=sflag, size = 0x4, offset = 0, fixed_abs, tag = 'sflag constant byte address 0x0 - dummy sync flag']
  #allocation33 [shape = 's32[]', space=sflag, size = 0x4, offset = 0, fixed_abs, tag = 'sflag constant byte address 0x0 - dummy sync flag']
  #allocation35 [shape = 's32[]', space=sflag, size = 0x4, offset = 0, fixed_abs, tag = 'sflag constant byte address 0x0 - dummy sync flag']
  #allocation36 [shape = 's32[]', space=sflag, size = 0x4, offset = 0, fixed_abs, tag = 'sflag constant byte address 0x0 - dummy sync flag']
  #allocation37 [shape = 's32[]', space=sflag, size = 0x4, offset = 0, fixed_abs, tag = 'sflag constant byte address 0x0 - dummy sync flag']
  #allocation39 [shape = 's32[]', space=sflag, size = 0x4, offset = 0, fixed_abs, tag = 'sflag constant byte address 0x0 - dummy sync flag']
  #allocation41 [shape = 's32[]', space=sflag, size = 0x4, offset = 0, fixed_abs, tag = 'sflag constant byte address 0x0 - dummy sync flag']
  #allocation43 [shape = 's32[]', space=sflag, size = 0x4, offset = 0, fixed_abs, tag = 'sflag constant byte address 0x0 - dummy sync flag']
  #allocation45 [shape = 's32[]', space=sflag, size = 0x4, offset = 0, fixed_abs, tag = 'sflag constant byte address 0x0 - dummy sync flag']
  #allocation46 [shape = 's32[]', space=sflag, size = 0x4, offset = 0, fixed_abs, tag = 'sflag constant byte address 0x0 - dummy sync flag']
  %s0 = inlined_call_operand.hbm [shape: s32[5], index: 0, kind: input, shape index: {}]
  %s1 = inlined_call_operand.hbm [shape: f32[8,768], index: 1, kind: input, shape index: {}]
  %s2 = inlined_call_operand.hbm [shape: f32[8,768], index: 2, kind: input, shape index: {}]
  %s3 = inlined_call_operand.hbm [shape: f32[8,256], index: 3, kind: input, shape index: {}]
  %s4 = inlined_call_operand.hbm [shape: f32[8,256], index: 4, kind: input, shape index: {}]
  %s5 = inlined_call_operand.vmem [shape: f32[8,128], index: 5, kind: input, shape index: {}]
  %s6 = inlined_call_operand.hbm [shape: f32[5,768], index: 6, kind: output, shape index: {0}]
  %s7 = inlined_call_operand.hbm [shape: f32[5,768], index: 7, kind: output, shape index: {1}]
  %s8 = inlined_call_operand.hbm [shape: f32[5,256], index: 8, kind: output, shape index: {2}]
  %s9 = inlined_call_operand.hbm [shape: f32[5,256], index: 9, kind: output, shape index: {3}]
  %s10 = inlined_call_operand.hbm [shape: f32[5,128], index: 10, kind: output, shape index: {4}]
  %11 = xla_tuple %s6, %s7, %s8, %s9, %s10
  %s12 = sld [smem:[#allocation0]]
  $region33: #{tpu_custom_call.1} parent=0
    _
  %s14 = ssub.s32 1, %s12
  %s15 = scalar_select 0, %s14, %s12
  %17 = dma.hbm_to_smem %s0, 16, [#allocation4], [#allocation3]
  %18 = dma.done [#allocation3], 16
  %19 = sfence
  loop: start=0, step=1, limit=6
  $region2: #{tpu_custom_call.1} parent=0 // loop_pre_header
    _
  $region3: #{tpu_custom_call.1} parent=0 // loop_header
    %s21 = sphi 0, %s25
    %p22 = scmp.ge.s32.totalorder %s21, 6
    %s26 = sphi 0, %s34
    %s27 = sphi 0, %s30
  $region4: #{tpu_custom_call.1} parent=0 // loop_header_branch
    %24 = sbr.rel (%p22) target = $region8
  $region5: #{tpu_custom_call.1} parent=0 // loop_body
    %s28 = sadd.s32 1, %s27
    %p29 = scmp.ge.s32.totalorder %s28, 3
    %s30 = scalar_select %p29, 0, %s28
    %s31 = sadd.s32 1, %s26
    %s32 = scalar_select %p29, %s31, %s26
    %p33 = scmp.ge.s32.totalorder %s32, 2
    %s34 = scalar_select %p33, 0, %s32
    %p35 = scmp.eq.s32.totalorder %s27, 0
    // Predicated region
    $region9: #{tpu_custom_call.1} parent=5 // pred_check
      %p36 = pneg %p35
    $region10: #{tpu_custom_call.1} parent=5 // pred_check_branch
      %38 = sbr.rel (%p36) target = $region12
    $region11: #{tpu_custom_call.1} parent=5 // pred_region
      #allocation6 [shape = 'u32[3]{0}', space=smem, size = 0xc, scoped, tag = 'DMA stride descriptor']
      #allocation8 [shape = 'u32[3]{0}', space=smem, size = 0xc, scoped, tag = 'DMA stride descriptor']
      #allocation10 [shape = 'u32[3]{0}', space=smem, size = 0xc, scoped, tag = 'DMA stride descriptor']
      #allocation12 [shape = 'u32[3]{0}', space=smem, size = 0xc, scoped, tag = 'DMA stride descriptor']
      #allocation18 [shape = 'u32[3]{0}', space=smem, size = 0xc, scoped, tag = 'DMA stride descriptor']
      #allocation20 [shape = 'u32[3]{0}', space=smem, size = 0xc, scoped, tag = 'DMA stride descriptor']
      #allocation22 [shape = 'u32[3]{0}', space=smem, size = 0xc, scoped, tag = 'DMA stride descriptor']
      #allocation24 [shape = 'u32[3]{0}', space=smem, size = 0xc, scoped, tag = 'DMA stride descriptor']
      #allocation28 [shape = 'u32[3]{0}', space=smem, size = 0xc, scoped, tag = 'DMA stride descriptor']
      #allocation30 [shape = 'u32[3]{0}', space=smem, size = 0xc, scoped, tag = 'DMA stride descriptor']
      #allocation32 [shape = 'u32[3]{0}', space=smem, size = 0xc, scoped, tag = 'DMA stride descriptor']
      #allocation34 [shape = 'u32[3]{0}', space=smem, size = 0xc, scoped, tag = 'DMA stride descriptor']
      %s39 = smul.u32 %s26, 3
      %p40 = scmp.lt.s32.totalorder %s39, 4
      %s41 = scalar_select %p40, %s39, 4
      %s42 = sld [smem:[#allocation4 + %s41]]
      %s43 = sshrl.u32 %s42, 3
      %s44 = sand.u32 %s42, 7
      %s45 = smul.u32 %s43, 48
      %s46 = sadd.s32 %s44, %s45
      %s47 = smul.addr %s46, 16
      %s48 = scalar_lea.hbm %s1, %s47
      %s49 = sshrl.u32 %s41, 3
      %s50 = sand.u32 %s41, 7
      %s51 = smul.u32 %s49, 48
      %s52 = sadd.s32 %s50, %s51
      %s53 = smul.addr %s52, 16
      %s54 = scalar_lea.hbm %s6, %s53
      %s56 = sshll.u32 1, 14
      %s57 = sxor.u32 4294967295, %s56
      %61 = sst [smem:[#allocation6]] 128
      %s62 = scalar_lea.smem [#allocation6], 1
      %63 = sst [smem:[%s62]] 128
      %s64 = scalar_lea.smem [#allocation6], 2
      %65 = sst [smem:[%s64]] 1
      %67 = dma.general %s48, 96, %s54, [#allocation2], 131072, [#allocation6], 0, 0
      %s68 = smul.addr %s46, 16
      %s69 = scalar_lea.hbm %s2, %s68
      %s70 = smul.addr %s52, 16
      %s71 = scalar_lea.hbm %s7, %s70
      %s72 = scalar_lea.sflag [#allocation2], 1
      %s74 = sshll.u32 1, 14
      %s75 = sxor.u32 4294967295, %s74
      %79 = sst [smem:[#allocation8]] 128
      %s80 = scalar_lea.smem [#allocation8], 1
      %81 = sst [smem:[%s80]] 128
      %s82 = scalar_lea.smem [#allocation8], 2
      %83 = sst [smem:[%s82]] 1
      %85 = dma.general %s69, 96, %s71, %s72, 131072, [#allocation8], 0, 0
      %s86 = smul.u32 %s43, 16
      %s87 = sadd.s32 %s44, %s86
      %s88 = smul.addr %s87, 16
      %s89 = scalar_lea.hbm %s3, %s88
      %s90 = smul.u32 %s49, 16
      %s91 = sadd.s32 %s50, %s90
      %s92 = smul.addr %s91, 16
      %s93 = scalar_lea.hbm %s8, %s92
      %s94 = scalar_lea.sflag [#allocation2], 2
      %s96 = sshll.u32 1, 14
      %s97 = sxor.u32 4294967295, %s96
      %101 = sst [smem:[#allocation10]] 128
      %s102 = scalar_lea.smem [#allocation10], 1
      %103 = sst [smem:[%s102]] 128
      %s104 = scalar_lea.smem [#allocation10], 2
      %105 = sst [smem:[%s104]] 1
      %107 = dma.general %s89, 32, %s93, %s94, 131072, [#allocation10], 0, 0
      %s108 = smul.addr %s87, 16
      %s109 = scalar_lea.hbm %s4, %s108
      %s110 = smul.addr %s91, 16
      %s111 = scalar_lea.hbm %s9, %s110
      %s112 = scalar_lea.sflag [#allocation2], 3
      %s114 = sshll.u32 1, 14
      %s115 = sxor.u32 4294967295, %s114
      %119 = sst [smem:[#allocation12]] 128
      %s120 = scalar_lea.smem [#allocation12], 1
      %121 = sst [smem:[%s120]] 128
      %s122 = scalar_lea.smem [#allocation12], 2
      %123 = sst [smem:[%s122]] 1
      %125 = dma.general %s109, 32, %s111, %s112, 131072, [#allocation12], 0, 0
      %s126 = scalar_lea.vmem %s5, %s42
      %s127 = smul.addr %s41, 16
      %s128 = scalar_lea.hbm %s10, %s127
      %s129 = scalar_lea.sflag [#allocation2], 4
      // Predicated region
      $region13: #{tpu_custom_call.1} parent=11 // pred_check
        _
      $region14: #{tpu_custom_call.1} parent=11 // pred_check_branch
        %131 = sbr.rel target = $region16
      $region15: #{tpu_custom_call.1} parent=11 // pred_region
        %132 = sst [smem:[#allocation15]] [#allocation14]
        %133 = sst [smem:[#allocation16]] [#allocation13]
      $region16: #{tpu_custom_call.1} parent=11 // pred_fallthru
        _
      %135 = shalt.err (0)
      %s137 = sshll.u32 %s126, 4
      %s138 = int_to_ptr.vmem [resolvable:$true] %s137
      %140 = dma.vmem_to_hbm [thread:$0]  %s138, 16, %s128, %s129
      %s141 = sadd.s32 %s39, 1
      %p142 = scmp.lt.s32.totalorder %s141, 4
      %s143 = scalar_select %p142, %s141, 4
      %s144 = sld [smem:[#allocation4 + %s143]]
      %s145 = sshrl.u32 %s144, 3
      %s146 = sand.u32 %s144, 7
      %s147 = smul.u32 %s145, 48
      %s148 = sadd.s32 %s146, %s147
      %s149 = smul.addr %s148, 16
      %s150 = scalar_lea.hbm %s1, %s149
      %s151 = sshrl.u32 %s143, 3
      %s152 = sand.u32 %s143, 7
      %s153 = smul.u32 %s151, 48
      %s154 = sadd.s32 %s152, %s153
      %s155 = smul.addr %s154, 16
      %s156 = scalar_lea.hbm %s6, %s155
      %s157 = scalar_lea.sflag [#allocation2], 5
      %s159 = sshll.u32 1, 14
      %s160 = sxor.u32 4294967295, %s159
      %164 = sst [smem:[#allocation18]] 128
      %s165 = scalar_lea.smem [#allocation18], 1
      %166 = sst [smem:[%s165]] 128
      %s167 = scalar_lea.smem [#allocation18], 2
      %168 = sst [smem:[%s167]] 1
      %170 = dma.general %s150, 96, %s156, %s157, 131072, [#allocation18], 0, 0
      %s171 = smul.addr %s148, 16
      %s172 = scalar_lea.hbm %s2, %s171
      %s173 = smul.addr %s154, 16
      %s174 = scalar_lea.hbm %s7, %s173
      %s175 = scalar_lea.sflag [#allocation2], 6
      %s177 = sshll.u32 1, 14
      %s178 = sxor.u32 4294967295, %s177
      %182 = sst [smem:[#allocation20]] 128
      %s183 = scalar_lea.smem [#allocation20], 1
      %184 = sst [smem:[%s183]] 128
      %s185 = scalar_lea.smem [#allocation20], 2
      %186 = sst [smem:[%s185]] 1
      %188 = dma.general %s172, 96, %s174, %s175, 131072, [#allocation20], 0, 0
      %s189 = smul.u32 %s145, 16
      %s190 = sadd.s32 %s146, %s189
      %s191 = smul.addr %s190, 16
      %s192 = scalar_lea.hbm %s3, %s191
      %s193 = smul.u32 %s151, 16
      %s194 = sadd.s32 %s152, %s193
      %s195 = smul.addr %s194, 16
      %s196 = scalar_lea.hbm %s8, %s195
      %s197 = scalar_lea.sflag [#allocation2], 7
      %s199 = sshll.u32 1, 14
      %s200 = sxor.u32 4294967295, %s199
      %204 = sst [smem:[#allocation22]] 128
      %s205 = scalar_lea.smem [#allocation22], 1
      %206 = sst [smem:[%s205]] 128
      %s207 = scalar_lea.smem [#allocation22], 2
      %208 = sst [smem:[%s207]] 1
      %210 = dma.general %s192, 32, %s196, %s197, 131072, [#allocation22], 0, 0
      %s211 = smul.addr %s190, 16
      %s212 = scalar_lea.hbm %s4, %s211
      %s213 = smul.addr %s194, 16
      %s214 = scalar_lea.hbm %s9, %s213
      %s215 = scalar_lea.sflag [#allocation2], 8
      %s217 = sshll.u32 1, 14
      %s218 = sxor.u32 4294967295, %s217
      %222 = sst [smem:[#allocation24]] 128
      %s223 = scalar_lea.smem [#allocation24], 1
      %224 = sst [smem:[%s223]] 128
      %s225 = scalar_lea.smem [#allocation24], 2
      %226 = sst [smem:[%s225]] 1
      %228 = dma.general %s212, 32, %s214, %s215, 131072, [#allocation24], 0, 0
      %s229 = scalar_lea.vmem %s5, %s144
      %s230 = smul.addr %s143, 16
      %s231 = scalar_lea.hbm %s10, %s230
      %s232 = scalar_lea.sflag [#allocation2], 9
      // Predicated region
      $region17: #{tpu_custom_call.1} parent=11 // pred_check
        _
      $region18: #{tpu_custom_call.1} parent=11 // pred_check_branch
        %234 = sbr.rel target = $region20
      $region19: #{tpu_custom_call.1} parent=11 // pred_region
        %235 = sst [smem:[#allocation15]] [#allocation26]
        %236 = sst [smem:[#allocation16]] [#allocation25]
      $region20: #{tpu_custom_call.1} parent=11 // pred_fallthru
        _
      %238 = shalt.err (0)
      %s240 = sshll.u32 %s229, 4
      %s241 = int_to_ptr.vmem [resolvable:$true] %s240
      %243 = dma.vmem_to_hbm [thread:$0]  %s241, 16, %s231, %s232
      %s244 = sadd.s32 %s39, 2
      %p245 = scmp.lt.s32.totalorder %s244, 4
      %s246 = scalar_select %p245, %s244, 4
      %s247 = sld [smem:[#allocation4 + %s246]]
      %s248 = sshrl.u32 %s247, 3
      %s249 = sand.u32 %s247, 7
      %s250 = smul.u32 %s248, 48
      %s251 = sadd.s32 %s249, %s250
      %s252 = smul.addr %s251, 16
      %s253 = scalar_lea.hbm %s1, %s252
      %s254 = sshrl.u32 %s246, 3
      %s255 = sand.u32 %s246, 7
      %s256 = smul.u32 %s254, 48
      %s257 = sadd.s32 %s255, %s256
      %s258 = smul.addr %s257, 16
      %s259 = scalar_lea.hbm %s6, %s258
      %s260 = scalar_lea.sflag [#allocation2], 10
      %s262 = sshll.u32 1, 14
      %s263 = sxor.u32 4294967295, %s262
      %267 = sst [smem:[#allocation28]] 128
      %s268 = scalar_lea.smem [#allocation28], 1
      %269 = sst [smem:[%s268]] 128
      %s270 = scalar_lea.smem [#allocation28], 2
      %271 = sst [smem:[%s270]] 1
      %273 = dma.general %s253, 96, %s259, %s260, 131072, [#allocation28], 0, 0
      %s274 = smul.addr %s251, 16
      %s275 = scalar_lea.hbm %s2, %s274
      %s276 = smul.addr %s257, 16
      %s277 = scalar_lea.hbm %s7, %s276
      %s278 = scalar_lea.sflag [#allocation2], 11
      %s280 = sshll.u32 1, 14
      %s281 = sxor.u32 4294967295, %s280
      %285 = sst [smem:[#allocation30]] 128
      %s286 = scalar_lea.smem [#allocation30], 1
      %287 = sst [smem:[%s286]] 128
      %s288 = scalar_lea.smem [#allocation30], 2
      %289 = sst [smem:[%s288]] 1
      %291 = dma.general %s275, 96, %s277, %s278, 131072, [#allocation30], 0, 0
      %s292 = smul.u32 %s248, 16
      %s293 = sadd.s32 %s249, %s292
      %s294 = smul.addr %s293, 16
      %s295 = scalar_lea.hbm %s3, %s294
      %s296 = smul.u32 %s254, 16
      %s297 = sadd.s32 %s255, %s296
      %s298 = smul.addr %s297, 16
      %s299 = scalar_lea.hbm %s8, %s298
      %s300 = scalar_lea.sflag [#allocation2], 12
      %s302 = sshll.u32 1, 14
      %s303 = sxor.u32 4294967295, %s302
      %307 = sst [smem:[#allocation32]] 128
      %s308 = scalar_lea.smem [#allocation32], 1
      %309 = sst [smem:[%s308]] 128
      %s310 = scalar_lea.smem [#allocation32], 2
      %311 = sst [smem:[%s310]] 1
      %313 = dma.general %s295, 32, %s299, %s300, 131072, [#allocation32], 0, 0
      %s314 = smul.addr %s293, 16
      %s315 = scalar_lea.hbm %s4, %s314
      %s316 = smul.addr %s297, 16
      %s317 = scalar_lea.hbm %s9, %s316
      %s318 = scalar_lea.sflag [#allocation2], 13
      %s320 = sshll.u32 1, 14
      %s321 = sxor.u32 4294967295, %s320
      %325 = sst [smem:[#allocation34]] 128
      %s326 = scalar_lea.smem [#allocation34], 1
      %327 = sst [smem:[%s326]] 128
      %s328 = scalar_lea.smem [#allocation34], 2
      %329 = sst [smem:[%s328]] 1
      %331 = dma.general %s315, 32, %s317, %s318, 131072, [#allocation34], 0, 0
      %s332 = scalar_lea.vmem %s5, %s247
      %s333 = smul.addr %s246, 16
      %s334 = scalar_lea.hbm %s10, %s333
      %s335 = scalar_lea.sflag [#allocation2], 14
      // Predicated region
      $region21: #{tpu_custom_call.1} parent=11 // pred_check
        _
      $region22: #{tpu_custom_call.1} parent=11 // pred_check_branch
        %337 = sbr.rel target = $region24
      $region23: #{tpu_custom_call.1} parent=11 // pred_region
        %338 = sst [smem:[#allocation15]] [#allocation36]
        %339 = sst [smem:[#allocation16]] [#allocation35]
      $region24: #{tpu_custom_call.1} parent=11 // pred_fallthru
        _
      %341 = shalt.err (0)
      %s343 = sshll.u32 %s332, 4
      %s344 = int_to_ptr.vmem [resolvable:$true] %s343
      %346 = dma.vmem_to_hbm [thread:$0]  %s344, 16, %s334, %s335
    $region12: #{tpu_custom_call.1} parent=5 // pred_fallthru
      _
    %p347 = scmp.lt.s32.totalorder %s27, 0
    %s348 = ssub.s32 0, %s27
    %s349 = scalar_select %p347, %s348, %s27
    %s350 = sdiv.u32.pop %s349, 3
    %s351 = srem.u32.pop %s349, 3
    %s352 = ssub.s32 0, %s351
    %s353 = scalar_select %p347, %s352, %s351
    %p354 = scmp.ne.s32.totalorder %s353, 0
    %p355 = scmp.lt.s32.totalorder %s353, 0
    %p356 = pnand %p355, %p354
    %p357 = pneg %p356
    %s358 = sadd.s32 %s353, 3
    %s359 = scalar_select %p357, %s358, %s353
    %s360 = smul.u32 %s359, 5
    %s361 = scalar_lea.sflag [#allocation2], %s360
    %s362 = smul.u32 1, 6
    %s363 = sshll.u32 %s362, 4
    %364 = dma.done %s361, %s363
    %s365 = sadd.s32 1, %s360
    %s366 = scalar_lea.sflag [#allocation2], %s365
    %s367 = sshll.u32 %s362, 4
    %368 = dma.done %s366, %s367
    %s369 = sadd.s32 2, %s360
    %s370 = scalar_lea.sflag [#allocation2], %s369
    %s371 = smul.u32 1, 2
    %s372 = sshll.u32 %s371, 4
    %373 = dma.done %s370, %s372
    %s374 = sadd.s32 3, %s360
    %s375 = scalar_lea.sflag [#allocation2], %s374
    %s376 = sshll.u32 %s371, 4
    %377 = dma.done %s375, %s376
    %s378 = sadd.s32 4, %s360
    %s379 = scalar_lea.sflag [#allocation2], %s378
    %s380 = smul.u32 1, 1
    %s381 = sshll.u32 %s380, 4
    %382 = dma.done %s379, %s381
    %s383 = sadd.s32 %s27, 3
    %p384 = scmp.lt.s32.totalorder %s383, 3
    // Predicated region
    $region25: #{tpu_custom_call.1} parent=5 // pred_check
      %p385 = pneg %p384
    $region26: #{tpu_custom_call.1} parent=5 // pred_check_branch
      %387 = sbr.rel (%p385) target = $region28
    $region27: #{tpu_custom_call.1} parent=5 // pred_region
      #allocation38 [shape = 'u32[3]{0}', space=smem, size = 0xc, scoped, tag = 'DMA stride descriptor']
      #allocation40 [shape = 'u32[3]{0}', space=smem, size = 0xc, scoped, tag = 'DMA stride descriptor']
      #allocation42 [shape = 'u32[3]{0}', space=smem, size = 0xc, scoped, tag = 'DMA stride descriptor']
      #allocation44 [shape = 'u32[3]{0}', space=smem, size = 0xc, scoped, tag = 'DMA stride descriptor']
      %s388 = smul.u32 %s26, 3
      %s389 = sadd.s32 %s388, %s383
      %p390 = scmp.lt.s32.totalorder %s389, 4
      %s391 = scalar_select %p390, %s389, 4
      %s392 = sld [smem:[#allocation4 + %s391]]
      %s393 = sshrl.u32 %s392, 3
      %s394 = sand.u32 %s392, 7
      %s395 = smul.u32 %s393, 48
      %s396 = sadd.s32 %s394, %s395
      %s397 = smul.addr %s396, 16
      %s398 = scalar_lea.hbm %s1, %s397
      %s399 = sshrl.u32 %s391, 3
      %s400 = sand.u32 %s391, 7
      %s401 = smul.u32 %s399, 48
      %s402 = sadd.s32 %s400, %s401
      %s403 = smul.addr %s402, 16
      %s404 = scalar_lea.hbm %s6, %s403
      %s406 = sshll.u32 1, 14
      %s407 = sxor.u32 4294967295, %s406
      %411 = sst [smem:[#allocation38]] 128
      %s412 = scalar_lea.smem [#allocation38], 1
      %413 = sst [smem:[%s412]] 128
      %s414 = scalar_lea.smem [#allocation38], 2
      %415 = sst [smem:[%s414]] 1
      %417 = dma.general %s398, 96, %s404, %s361, 131072, [#allocation38], 0, 0
      %s418 = smul.addr %s396, 16
      %s419 = scalar_lea.hbm %s2, %s418
      %s420 = smul.addr %s402, 16
      %s421 = scalar_lea.hbm %s7, %s420
      %s423 = sshll.u32 1, 14
      %s424 = sxor.u32 4294967295, %s423
      %428 = sst [smem:[#allocation40]] 128
      %s429 = scalar_lea.smem [#allocation40], 1
      %430 = sst [smem:[%s429]] 128
      %s431 = scalar_lea.smem [#allocation40], 2
      %432 = sst [smem:[%s431]] 1
      %434 = dma.general %s419, 96, %s421, %s366, 131072, [#allocation40], 0, 0
      %s435 = smul.u32 %s393, 16
      %s436 = sadd.s32 %s394, %s435
      %s437 = smul.addr %s436, 16
      %s438 = scalar_lea.hbm %s3, %s437
      %s439 = smul.u32 %s399, 16
      %s440 = sadd.s32 %s400, %s439
      %s441 = smul.addr %s440, 16
      %s442 = scalar_lea.hbm %s8, %s441
      %s444 = sshll.u32 1, 14
      %s445 = sxor.u32 4294967295, %s444
      %449 = sst [smem:[#allocation42]] 128
      %s450 = scalar_lea.smem [#allocation42], 1
      %451 = sst [smem:[%s450]] 128
      %s452 = scalar_lea.smem [#allocation42], 2
      %453 = sst [smem:[%s452]] 1
      %455 = dma.general %s438, 32, %s442, %s370, 131072, [#allocation42], 0, 0
      %s456 = smul.addr %s436, 16
      %s457 = scalar_lea.hbm %s4, %s456
      %s458 = smul.addr %s440, 16
      %s459 = scalar_lea.hbm %s9, %s458
      %s461 = sshll.u32 1, 14
      %s462 = sxor.u32 4294967295, %s461
      %466 = sst [smem:[#allocation44]] 128
      %s467 = scalar_lea.smem [#allocation44], 1
      %468 = sst [smem:[%s467]] 128
      %s469 = scalar_lea.smem [#allocation44], 2
      %470 = sst [smem:[%s469]] 1
      %472 = dma.general %s457, 32, %s459, %s375, 131072, [#allocation44], 0, 0
      %s473 = scalar_lea.vmem %s5, %s392
      %s474 = smul.addr %s391, 16
      %s475 = scalar_lea.hbm %s10, %s474
      // Predicated region
      $region29: #{tpu_custom_call.1} parent=27 // pred_check
        _
      $region30: #{tpu_custom_call.1} parent=27 // pred_check_branch
        %477 = sbr.rel target = $region32
      $region31: #{tpu_custom_call.1} parent=27 // pred_region
        %478 = sst [smem:[#allocation15]] [#allocation46]
        %479 = sst [smem:[#allocation16]] [#allocation45]
      $region32: #{tpu_custom_call.1} parent=27 // pred_fallthru
        _
      %481 = shalt.err (0)
      %s483 = sshll.u32 %s473, 4
      %s484 = int_to_ptr.vmem [resolvable:$true] %s483
      %486 = dma.vmem_to_hbm [thread:$0]  %s484, 16, %s475, %s379
    $region28: #{tpu_custom_call.1} parent=5 // pred_fallthru
      _
  $region6: #{tpu_custom_call.1} parent=0 // loop_footer
    %s25 = sadd.s32 1, %s21
  $region7: #{tpu_custom_call.1} parent=0 // loop_footer_branch
    %20 = sbr.rel target = $region3
  $region8: #{tpu_custom_call.1} parent=0 // loop_exit
    _
  %487 = vsyncmov [#allocation2]
  %s488 = vpop.sfrf %487
  %p489 = scmp.eq.s32.totalorder %s488, 0
  %p490 = pneg %p489
  %492 = shalt.err (%p490)
  %s493 = scalar_lea.sflag [#allocation2], 1
  %494 = vsyncmov %s493
  %s495 = vpop.sfrf %494
  %p496 = scmp.eq.s32.totalorder %s495, 0
  %p497 = pneg %p496
  %499 = shalt.err (%p497)
  %s500 = scalar_lea.sflag [#allocation2], 2
  %501 = vsyncmov %s500
  %s502 = vpop.sfrf %501
  %p503 = scmp.eq.s32.totalorder %s502, 0
  %p504 = pneg %p503
  %506 = shalt.err (%p504)
  %s507 = scalar_lea.sflag [#allocation2], 3
  %508 = vsyncmov %s507
  %s509 = vpop.sfrf %508
  %p510 = scmp.eq.s32.totalorder %s509, 0
  %p511 = pneg %p510
  %513 = shalt.err (%p511)
  %s514 = scalar_lea.sflag [#allocation2], 4
  %515 = vsyncmov %s514
  %s516 = vpop.sfrf %515
  %p517 = scmp.eq.s32.totalorder %s516, 0
  %p518 = pneg %p517
  %520 = shalt.err (%p518)
  %s521 = scalar_lea.sflag [#allocation2], 5
  %522 = vsyncmov %s521
  %s523 = vpop.sfrf %522
  %p524 = scmp.eq.s32.totalorder %s523, 0
  %p525 = pneg %p524
  %527 = shalt.err (%p525)
  %s528 = scalar_lea.sflag [#allocation2], 6
  %529 = vsyncmov %s528
  %s530 = vpop.sfrf %529
  %p531 = scmp.eq.s32.totalorder %s530, 0
  %p532 = pneg %p531
  %534 = shalt.err (%p532)
  %s535 = scalar_lea.sflag [#allocation2], 7
  %536 = vsyncmov %s535
  %s537 = vpop.sfrf %536
  %p538 = scmp.eq.s32.totalorder %s537, 0
  %p539 = pneg %p538
  %541 = shalt.err (%p539)
  %s542 = scalar_lea.sflag [#allocation2], 8
  %543 = vsyncmov %s542
  %s544 = vpop.sfrf %543
  %p545 = scmp.eq.s32.totalorder %s544, 0
  %p546 = pneg %p545
  %548 = shalt.err (%p546)
  %s549 = scalar_lea.sflag [#allocation2], 9
  %550 = vsyncmov %s549
  %s551 = vpop.sfrf %550
  %p552 = scmp.eq.s32.totalorder %s551, 0
  %p553 = pneg %p552
  %555 = shalt.err (%p553)
  %s556 = scalar_lea.sflag [#allocation2], 10
  %557 = vsyncmov %s556
  %s558 = vpop.sfrf %557
  %p559 = scmp.eq.s32.totalorder %s558, 0
  %p560 = pneg %p559
  %562 = shalt.err (%p560)
  %s563 = scalar_lea.sflag [#allocation2], 11
  %564 = vsyncmov %s563
  %s565 = vpop.sfrf %564
  %p566 = scmp.eq.s32.totalorder %s565, 0
  %p567 = pneg %p566
  %569 = shalt.err (%p567)
  %s570 = scalar_lea.sflag [#allocation2], 12
  %571 = vsyncmov %s570
  %s572 = vpop.sfrf %571
  %p573 = scmp.eq.s32.totalorder %s572, 0
  %p574 = pneg %p573
  %576 = shalt.err (%p574)
  %s577 = scalar_lea.sflag [#allocation2], 13
  %578 = vsyncmov %s577
  %s579 = vpop.sfrf %578
  %p580 = scmp.eq.s32.totalorder %s579, 0
  %p581 = pneg %p580
  %583 = shalt.err (%p581)
  %s584 = scalar_lea.sflag [#allocation2], 14
  %585 = vsyncmov %s584
  %s586 = vpop.sfrf %585
  %p587 = scmp.eq.s32.totalorder %s586, 0
  %p588 = pneg %p587
  %590 = shalt.err (%p588)

</llo_original>
